<compile_context>
chip_gen: v6e
topology: v6e:2x2x1
jax: 0.10.0
libtpu: 0.0.40
codegen_flags: <defaults>
</compile_context>

<pallas_src>
import math

import jax
import jax.numpy as jnp
from jax.experimental import pallas as pl
from jax.experimental.pallas import tpu as pltpu


def _round_up(x, m):
    return (x + m - 1) // m * m


def _make_mlp_kernel(n_layers, act_dim):
    """Kernel body for an n_layers MLP (ReLU on all but the last layer).

    Arg layout: (x_ref, W0, b0, W1, b1, ..., out_ref). Everything is f32;
    matmuls accumulate in f32 on the MXU (which has huge slack here — the
    kernel is memory-bound, so no bf16 cast pass is worth its HBM traffic).
    """
    def kernel(x_ref, *rest):
        out_ref = rest[-1]
        wb = rest[:-1]
        h = x_ref[...]
        for l in range(n_layers):
            w = wb[2 * l][...]
            b = wb[2 * l + 1][...]                 # (1, d_out) broadcast bias
            acc = jnp.dot(h, w, preferred_element_type=jnp.float32) + b
            if l < n_layers - 1:
                h = jnp.maximum(acc, 0.0)
            else:
                # Last weight is lane-padded; slice the real act_dim columns in
                # VMEM and store a block spanning the full (small) minor dim.
                out_ref[...] = acc[:, :act_dim].astype(out_ref.dtype)
    return kernel


def prepare_params(weights, biases):
    """Keep weights/biases in f32 with their natural feature dims (they are
    VMEM-resident, so padding them buys nothing) except the final layer's
    output dim, which is zero-padded to a 128-lane multiple so the last matmul
    is lane-aligned; the kernel slices the real act_dim columns before storing."""
    pw = [W.astype(jnp.float32) for W in weights[:-1]]
    pb = [b.astype(jnp.float32).reshape(1, -1) for b in biases[:-1]]

    d_in, d_out = weights[-1].shape
    p_out = _round_up(d_out, 128)
    Wl = jnp.zeros((d_in, p_out), jnp.float32)
    Wl = Wl.at[:, :d_out].set(weights[-1].astype(jnp.float32))
    bl = jnp.zeros((1, p_out), jnp.float32)
    bl = bl.at[0, :d_out].set(biases[-1].astype(jnp.float32))
    return pw + [Wl], pb + [bl]


def coma_critic_forward(x, weights, biases, act_dim,
                        *, tile_m=2048, min_grid_steps=4):
    """Fused MLP forward: x [..., state_dim] -> [..., act_dim]."""
    lead = x.shape[:-1]
    state_dim = x.shape[-1]
    n_layers = len(weights)
    M = math.prod(lead) if lead else 1

    # Row tile: multiple of 8 sublanes; capped so the grid keeps >=
    # min_grid_steps steps (megacore sharding on v7x, DMA/compute overlap on
    # v5e/v6e) whenever M is large enough to allow it.
    cap = _round_up(max(-(-M // min_grid_steps), 8), 8)
    tile_m = max(8, min(_round_up(tile_m, 8), cap))
    grid = (pl.cdiv(M, tile_m),)        # partial last block handled by Pallas

    # No feature-dim padding, no dtype pre-pass: just a view-reshape.
    x2 = x.reshape(M, state_dim).astype(jnp.float32)

    in_specs = [pl.BlockSpec((tile_m, state_dim), lambda i: (i, 0))]
    flat_params = []
    for W, b in zip(weights, biases):
        in_specs.append(pl.BlockSpec(W.shape, lambda i: (0, 0)))   # VMEM-resident
        in_specs.append(pl.BlockSpec(b.shape, lambda i: (0, 0)))   # VMEM-resident
        flat_params += [W, b]
    out_spec = pl.BlockSpec((tile_m, act_dim), lambda i: (i, 0))

    # VMEM budget: params (with re-DMA buffer), double-buffered streamed x/out
    # tiles, in-kernel f32 intermediates, plus headroom. Cap < 64 MiB (v7x).
    widths = [W.shape[1] for W in weights]            # per-layer output widths
    param_bytes = 4 * sum(int(W.size) + int(b.size)
                          for W, b in zip(weights, biases))
    stream_bytes = 2 * 4 * tile_m * (state_dim + act_dim)
    inter_bytes = 4 * tile_m * sum(widths)
    vmem_limit = int(min(max(2 * param_bytes + stream_bytes + 2 * inter_bytes
                             + (4 << 20), 16 << 20), 48 << 20))

    out = pl.pallas_call(
        _make_mlp_kernel(n_layers, act_dim),
        out_shape=jax.ShapeDtypeStruct((M, act_dim), jnp.float32),
        grid=grid,
        in_specs=in_specs,
        out_specs=out_spec,
        compiler_params=pltpu.CompilerParams(
            dimension_semantics=("parallel",),
            vmem_limit_bytes=vmem_limit),
    )(x2, *flat_params)

    # Output already has the real act_dim — no post-kernel slice pass.
    return out.reshape(*lead, act_dim)


if __name__ == "__main__":
    # Small shapes consistent with COMA: per-(batch, agent) critic input.
    batch, n_agents = 2, 4
    state_dim, act_dim = 24, 8
    hidden_sizes = (64, 64)

    key = jax.random.PRNGKey(0)
    k_x, k_w, k_b = jax.random.split(key, 3)

    x = jax.random.normal(k_x, (batch, n_agents, state_dim), jnp.float32)

    # Unpadded f32 parameters (hidden layers + output layer), glorot-ish init.
    dims = (state_dim,) + tuple(hidden_sizes) + (act_dim,)
    weights, biases = [], []
    wkeys = jax.random.split(k_w, len(dims) - 1)
    bkeys = jax.random.split(k_b, len(dims) - 1)
    for kw, kb, d_in, d_out in zip(wkeys, bkeys, dims[:-1], dims[1:]):
        lim = (6.0 / (d_in + d_out)) ** 0.5
        weights.append(jax.random.uniform(kw, (d_in, d_out), jnp.float32, -lim, lim))
        biases.append(0.1 * jax.random.normal(kb, (d_out,), jnp.float32))

    pw, pb = prepare_params(weights, biases)
    out = coma_critic_forward(x, pw, pb, act_dim)
    out = jax.block_until_ready(out)

    # Pure-JAX f32 reference (module semantics).
    def ref_forward(xr, ws, bs):
        h = xr.reshape(-1, xr.shape[-1])
        for l, (W, b) in enumerate(zip(ws, bs)):
            h = h @ W + b
            if l < len(ws) - 1:
                h = jnp.maximum(h, 0.0)
        return h.reshape(*xr.shape[:-1], -1)

    ref = ref_forward(x, weights, biases)
    assert out.shape == ref.shape
    max_err = jnp.max(jnp.abs(out - ref))
    assert jnp.allclose(out, ref, atol=1e-2, rtol=1e-2), \
        f"mismatch vs reference: max abs err {max_err}"
    print("KERNEL_OK")
</pallas_src>

<mosaic_0001>
module attributes {stable_mosaic.version = 11 : i64} {
  func.func @kernel(%arg0: i32, %arg1: memref<8x24xf32, #tpu.memory_space<vmem>>, %arg2: memref<24x64xf32, #tpu.memory_space<vmem>>, %arg3: memref<1x64xf32, #tpu.memory_space<vmem>>, %arg4: memref<64x64xf32, #tpu.memory_space<vmem>>, %arg5: memref<1x64xf32, #tpu.memory_space<vmem>>, %arg6: memref<64x128xf32, #tpu.memory_space<vmem>>, %arg7: memref<1x128xf32, #tpu.memory_space<vmem>>, %arg8: memref<8x8xf32, #tpu.memory_space<vmem>>) attributes {dimension_semantics = [#tpu.dimension_semantics<parallel>], iteration_bounds = array<i64: 1>, scalar_prefetch = 0 : i64, scratch_operands = 0 : i64, tpu.core_type = #tpu.core_type<tc>, window_params = [{transform_indices = @transform_0, window_bounds = array<i64: 8, 24>}, {pipeline_mode = #tpu.pipeline_mode<synchronous>, transform_indices = @transform_1, window_bounds = array<i64: 24, 64>}, {pipeline_mode = #tpu.pipeline_mode<synchronous>, transform_indices = @transform_2, window_bounds = array<i64: 1, 64>}, {pipeline_mode = #tpu.pipeline_mode<synchronous>, transform_indices = @transform_3, window_bounds = array<i64: 64, 64>}, {pipeline_mode = #tpu.pipeline_mode<synchronous>, transform_indices = @transform_4, window_bounds = array<i64: 1, 64>}, {pipeline_mode = #tpu.pipeline_mode<synchronous>, transform_indices = @transform_5, window_bounds = array<i64: 64, 128>}, {pipeline_mode = #tpu.pipeline_mode<synchronous>, transform_indices = @transform_6, window_bounds = array<i64: 1, 128>}, {transform_indices = @transform_7, window_bounds = array<i64: 8, 8>}]} {
    %c0 = arith.constant 0 : index
    %c0_0 = arith.constant 0 : index
    %0 = vector.load %arg1[%c0, %c0_0] : memref<8x24xf32, #tpu.memory_space<vmem>>, vector<8x24xf32>
    %c0_1 = arith.constant 0 : index
    %c0_2 = arith.constant 0 : index
    %1 = vector.load %arg2[%c0_1, %c0_2] : memref<24x64xf32, #tpu.memory_space<vmem>>, vector<24x64xf32>
    %c0_3 = arith.constant 0 : index
    %c0_4 = arith.constant 0 : index
    %2 = vector.load %arg3[%c0_3, %c0_4] : memref<1x64xf32, #tpu.memory_space<vmem>>, vector<1x64xf32>
    %cst = arith.constant dense<0.000000e+00> : vector<8x64xf32>
    %3 = tpu.matmul %0, %1, %cst {dimension_numbers = #tpu.dot_dimension_numbers<[1], [0], [0], [1], [0, 0, 1, 1], [], []>} : vector<8x24xf32>, vector<24x64xf32>, vector<8x64xf32> -> vector<8x64xf32>
    %4 = vector.broadcast %2 : vector<1x64xf32> to vector<8x64xf32>
    %5 = arith.addf %3, %4 : vector<8x64xf32>
    %cst_5 = arith.constant 0.000000e+00 : f32
    %6 = vector.broadcast %cst_5 : f32 to vector<8x64xf32>
    %7 = arith.maximumf %5, %6 : vector<8x64xf32>
    %c0_6 = arith.constant 0 : index
    %c0_7 = arith.constant 0 : index
    %8 = vector.load %arg4[%c0_6, %c0_7] : memref<64x64xf32, #tpu.memory_space<vmem>>, vector<64x64xf32>
    %c0_8 = arith.constant 0 : index
    %c0_9 = arith.constant 0 : index
    %9 = vector.load %arg5[%c0_8, %c0_9] : memref<1x64xf32, #tpu.memory_space<vmem>>, vector<1x64xf32>
    %cst_10 = arith.constant dense<0.000000e+00> : vector<8x64xf32>
    %10 = tpu.matmul %7, %8, %cst_10 {dimension_numbers = #tpu.dot_dimension_numbers<[1], [0], [0], [1], [0, 0, 1, 1], [], []>} : vector<8x64xf32>, vector<64x64xf32>, vector<8x64xf32> -> vector<8x64xf32>
    %11 = vector.broadcast %9 : vector<1x64xf32> to vector<8x64xf32>
    %12 = arith.addf %10, %11 : vector<8x64xf32>
    %cst_11 = arith.constant 0.000000e+00 : f32
    %13 = vector.broadcast %cst_11 : f32 to vector<8x64xf32>
    %14 = arith.maximumf %12, %13 : vector<8x64xf32>
    %c0_12 = arith.constant 0 : index
    %c0_13 = arith.constant 0 : index
    %15 = vector.load %arg6[%c0_12, %c0_13] : memref<64x128xf32, #tpu.memory_space<vmem>>, vector<64x128xf32>
    %c0_14 = arith.constant 0 : index
    %c0_15 = arith.constant 0 : index
    %16 = vector.load %arg7[%c0_14, %c0_15] : memref<1x128xf32, #tpu.memory_space<vmem>>, vector<1x128xf32>
    %cst_16 = arith.constant dense<0.000000e+00> : vector<8x128xf32>
    %17 = tpu.matmul %14, %15, %cst_16 {dimension_numbers = #tpu.dot_dimension_numbers<[1], [0], [0], [1], [0, 0, 1, 1], [], []>} : vector<8x64xf32>, vector<64x128xf32>, vector<8x128xf32> -> vector<8x128xf32>
    %18 = vector.broadcast %16 : vector<1x128xf32> to vector<8x128xf32>
    %19 = arith.addf %17, %18 : vector<8x128xf32>
    %20 = vector.extract_strided_slice %19 {offsets = [0, 0], sizes = [8, 8], strides = [1, 1]} : vector<8x128xf32> to vector<8x8xf32>
    %c0_17 = arith.constant 0 : index
    %c0_18 = arith.constant 0 : index
    %21 = vector.load %arg8[%c0_17, %c0_18] : memref<8x8xf32, #tpu.memory_space<vmem>>, vector<8x8xf32>
    tpu.vector_store %arg8[%c0_17, %c0_18], %20 {strides = array<i32>} : memref<8x8xf32, #tpu.memory_space<vmem>>, vector<8x8xf32>,
    return
  }
  func.func @transform_0(%arg0: i32) -> (i32, i32) {
    %c0_i32 = arith.constant 0 : i32
    %c0_i32_0 = arith.constant 0 : i32
    return %arg0, %c0_i32 : i32, i32
  }
  func.func @transform_1(%arg0: i32) -> (i32, i32) {
    %c0_i32 = arith.constant 0 : i32
    %c0_i32_0 = arith.constant 0 : i32
    %c0_i32_1 = arith.constant 0 : i32
    return %c0_i32, %c0_i32_0 : i32, i32
  }
  func.func @transform_2(%arg0: i32) -> (i32, i32) {
    %c0_i32 = arith.constant 0 : i32
    %c0_i32_0 = arith.constant 0 : i32
    %c0_i32_1 = arith.constant 0 : i32
    return %c0_i32, %c0_i32_0 : i32, i32
  }
  func.func @transform_3(%arg0: i32) -> (i32, i32) {
    %c0_i32 = arith.constant 0 : i32
    %c0_i32_0 = arith.constant 0 : i32
    %c0_i32_1 = arith.constant 0 : i32
    return %c0_i32, %c0_i32_0 : i32, i32
  }
  func.func @transform_4(%arg0: i32) -> (i32, i32) {
    %c0_i32 = arith.constant 0 : i32
    %c0_i32_0 = arith.constant 0 : i32
    %c0_i32_1 = arith.constant 0 : i32
    return %c0_i32, %c0_i32_0 : i32, i32
  }
  func.func @transform_5(%arg0: i32) -> (i32, i32) {
    %c0_i32 = arith.constant 0 : i32
    %c0_i32_0 = arith.constant 0 : i32
    %c0_i32_1 = arith.constant 0 : i32
    return %c0_i32, %c0_i32_0 : i32, i32
  }
  func.func @transform_6(%arg0: i32) -> (i32, i32) {
    %c0_i32 = arith.constant 0 : i32
    %c0_i32_0 = arith.constant 0 : i32
    %c0_i32_1 = arith.constant 0 : i32
    return %c0_i32, %c0_i32_0 : i32, i32
  }
  func.func @transform_7(%arg0: i32) -> (i32, i32) {
    %c0_i32 = arith.constant 0 : i32
    %c0_i32_0 = arith.constant 0 : i32
    return %arg0, %c0_i32 : i32, i32
  }
}

</mosaic_0001>

<llo_original>
// kernel: tpu_custom_call.1
$region0: #{tpu_custom_call.1}
  #allocation0 [shape = 'u32[]', space=smem, size = 0x4, offset = 0x4, fixed_abs, tag = 'smem constant byte address 0x4 - core index']
  #allocation1 [shape = 'u32[144,128]{1,0:T(1,128)}', space=vmem, size = 0x12000, scoped, tag = 'internal scratch']
  %s0 = inlined_call_operand.hbm [shape: f32[8,24], index: 0, kind: input, shape index: {}]
  %s1 = inlined_call_operand.hbm [shape: f32[24,64], index: 1, kind: input, shape index: {}]
  %s2 = inlined_call_operand.vmem [shape: f32[1,64], index: 2, kind: input, shape index: {}]
  %s3 = inlined_call_operand.hbm [shape: f32[64,64], index: 3, kind: input, shape index: {}]
  %s4 = inlined_call_operand.vmem [shape: f32[1,64], index: 4, kind: input, shape index: {}]
  %s5 = inlined_call_operand.hbm [shape: f32[64,128], index: 5, kind: input, shape index: {}]
  %s6 = inlined_call_operand.vmem [shape: f32[1,128], index: 6, kind: input, shape index: {}]
  %s7 = inlined_call_operand.hbm [shape: f32[8,8], index: 7, kind: output, shape index: {}]
  %s8 = sld [smem:[#allocation0]]
  $region54: #{tpu_custom_call.1} parent=0
    _
  %s10 = ssub.s32 1, %s8
  %s11 = scalar_select 0, %s10, %s8
  $region1: #{tpu_custom_call.1} parent=0
    #allocation2 [shape = 'u8[4096]{0}', space=vmem, size = 0x1000, scoped, tag = 'input window, operand 0, single buffered']
    #allocation3 [shape = 's32[1]{0}', space=sflag, size = 0x4, scoped, tag = 'scoped memory for tpu_custom_call.1']
    #allocation4 [shape = 's32[1]{0}', space=sflag, size = 0x4, scoped, tag = 'scoped memory for tpu_custom_call.1']
    #allocation5 [shape = 'u8[12288]{0}', space=vmem, size = 0x3000, scoped, tag = 'input window, operand 1, single buffered']
    #allocation6 [shape = 's32[1]{0}', space=sflag, size = 0x4, scoped, tag = 'scoped memory for tpu_custom_call.1']
    #allocation7 [shape = 'u8[32768]{0}', space=vmem, size = 0x8000, scoped, tag = 'input window, operand 3, single buffered']
    #allocation8 [shape = 'u8[32768]{0}', space=vmem, size = 0x8000, scoped, tag = 'input window, operand 5, single buffered']
    #allocation9 [shape = 's32[1]{0}', space=sflag, size = 0x4, scoped, tag = 'scoped memory for tpu_custom_call.1']
    #allocation10 [shape = 'u8[4096]{0}', space=vmem, size = 0x1000, scoped, tag = 'output window, operand 0, single buffered']
    %12 = vsyncpa [#allocation3], 0
    %13 = vsyncpa [#allocation6], 0
    %14 = vsyncpa [#allocation9], 0
    %15 = vsyncpa [#allocation4], 0
    // Predicated region
    $region2: #{tpu_custom_call.1} parent=1 // pred_check
      _
    $region3: #{tpu_custom_call.1} parent=1 // pred_check_branch
      %17 = sbr.rel (0) target = $region5
    $region4: #{tpu_custom_call.1} parent=1 // pred_region
      %s19 = ssub.s32 128, 128
      %20 = vsyncadd [#allocation3], %s19
      %s22 = sshll.u32 [#allocation2], 4
      %s23 = int_to_ptr.vmem [resolvable:$true] %s22
      %25 = dma.hbm_to_vmem [thread:$0]  %s0, 128, %s23, [#allocation3]
    $region5: #{tpu_custom_call.1} parent=1 // pred_fallthru
      _
    // Predicated region
    $region6: #{tpu_custom_call.1} parent=1 // pred_check
      _
    $region7: #{tpu_custom_call.1} parent=1 // pred_check_branch
      %27 = sbr.rel (0) target = $region9
    $region8: #{tpu_custom_call.1} parent=1 // pred_region
      %s29 = ssub.s32 384, 384
      %30 = vsyncadd [#allocation6], %s29
      %s31 = sshll.u32 [#allocation5], 4
      %s32 = int_to_ptr.vmem [resolvable:$true] %s31
      %37 = dma.hbm_to_vmem [thread:$0]  %s1, 384, %s32, [#allocation6], 128, 128, 8
    $region9: #{tpu_custom_call.1} parent=1 // pred_fallthru
      _
    // Predicated region
    $region10: #{tpu_custom_call.1} parent=1 // pred_check
      _
    $region11: #{tpu_custom_call.1} parent=1 // pred_check_branch
      %39 = sbr.rel (0) target = $region13
    $region12: #{tpu_custom_call.1} parent=1 // pred_region
      _
    $region13: #{tpu_custom_call.1} parent=1 // pred_fallthru
      _
    // Predicated region
    $region14: #{tpu_custom_call.1} parent=1 // pred_check
      _
    $region15: #{tpu_custom_call.1} parent=1 // pred_check_branch
      %41 = sbr.rel (0) target = $region17
    $region16: #{tpu_custom_call.1} parent=1 // pred_region
      %s43 = ssub.s32 1024, 1024
      %44 = vsyncadd [#allocation6], %s43
      %s45 = sshll.u32 [#allocation7], 4
      %s46 = int_to_ptr.vmem [resolvable:$true] %s45
      %51 = dma.hbm_to_vmem [thread:$0]  %s3, 1024, %s46, [#allocation6], 128, 128, 8
    $region17: #{tpu_custom_call.1} parent=1 // pred_fallthru
      _
    // Predicated region
    $region18: #{tpu_custom_call.1} parent=1 // pred_check
      _
    $region19: #{tpu_custom_call.1} parent=1 // pred_check_branch
      %53 = sbr.rel (0) target = $region21
    $region20: #{tpu_custom_call.1} parent=1 // pred_region
      _
    $region21: #{tpu_custom_call.1} parent=1 // pred_fallthru
      _
    // Predicated region
    $region22: #{tpu_custom_call.1} parent=1 // pred_check
      _
    $region23: #{tpu_custom_call.1} parent=1 // pred_check_branch
      %55 = sbr.rel (0) target = $region25
    $region24: #{tpu_custom_call.1} parent=1 // pred_region
      %s57 = ssub.s32 1024, 1024
      %58 = vsyncadd [#allocation9], %s57
      %s59 = sshll.u32 [#allocation8], 4
      %s60 = int_to_ptr.vmem [resolvable:$true] %s59
      %65 = dma.hbm_to_vmem [thread:$0]  %s5, 1024, %s60, [#allocation9], 128, 128, 8
    $region25: #{tpu_custom_call.1} parent=1 // pred_fallthru
      _
    // Predicated region
    $region26: #{tpu_custom_call.1} parent=1 // pred_check
      _
    $region27: #{tpu_custom_call.1} parent=1 // pred_check_branch
      %67 = sbr.rel (0) target = $region29
    $region28: #{tpu_custom_call.1} parent=1 // pred_region
      _
    $region29: #{tpu_custom_call.1} parent=1 // pred_fallthru
      _
    // Predicated region
    $region30: #{tpu_custom_call.1} parent=1 // pred_check
      _
    $region31: #{tpu_custom_call.1} parent=1 // pred_check_branch
      %69 = sbr.rel (0) target = $region33
    $region32: #{tpu_custom_call.1} parent=1 // pred_region
      %70 = dma.done [#allocation3], 128
    $region33: #{tpu_custom_call.1} parent=1 // pred_fallthru
      _
    // Predicated region
    $region34: #{tpu_custom_call.1} parent=1 // pred_check
      _
    $region35: #{tpu_custom_call.1} parent=1 // pred_check_branch
      %72 = sbr.rel (0) target = $region37
    $region36: #{tpu_custom_call.1} parent=1 // pred_region
      %73 = dma.done [#allocation6], 384
    $region37: #{tpu_custom_call.1} parent=1 // pred_fallthru
      _
    // Predicated region
    $region38: #{tpu_custom_call.1} parent=1 // pred_check
      _
    $region39: #{tpu_custom_call.1} parent=1 // pred_check_branch
      %75 = sbr.rel (0) target = $region41
    $region40: #{tpu_custom_call.1} parent=1 // pred_region
      %76 = dma.done [#allocation6], 1024
    $region41: #{tpu_custom_call.1} parent=1 // pred_fallthru
      _
    // Predicated region
    $region42: #{tpu_custom_call.1} parent=1 // pred_check
      _
    $region43: #{tpu_custom_call.1} parent=1 // pred_check_branch
      %78 = sbr.rel (0) target = $region45
    $region44: #{tpu_custom_call.1} parent=1 // pred_region
      %79 = dma.done [#allocation9], 1024
    $region45: #{tpu_custom_call.1} parent=1 // pred_fallthru
      _
    %v80 = vld [vmem:[#allocation2] sm:$0xff]
    %v81 = vld [vmem:[#allocation5] sm:$0xff]
    %v82 = vld [vmem:[#allocation5 + $0x8] sm:$0xff]
    %v83 = vld [vmem:[#allocation5 + $0x10] sm:$0xff]
    %v84 = vld [vmem:[%s2] sm:$0x1]
    %v86 = vlaneseq
    %v87 = vshrl.u32 %v86, 7
    %v88 = vsub.s32 0, %v87
    %v89 = vrot.slane %v84, %v88
    %vm91 = vcmask 195584
    %v93 = vsel %vm91, %v80, 0
    %95 = vmatprep.subr.mxu0 0.0
    %96 = vmatpush1.msra.mxu0 0.0
    %97 = vmatprep.subr.mxu0 0.0
    %98 = vmatpush1.msra.mxu0 0.0
    %99 = vmatprep.subr.mxu0 0.0
    %100 = vmatpush1.msra.mxu0 0.0
    %101 = vmatprep.subr.mxu0 0.0
    %102 = vmatpush1.msra.mxu0 0.0
    %103 = vmatprep.subr.mxu0 0.0
    %104 = vmatpush1.msra.mxu0 0.0
    %105 = vmatprep.subr.mxu0 0.0
    %106 = vmatpush1.msra.mxu0 0.0
    %107 = vmatprep.subr.mxu0 0.0
    %108 = vmatpush1.msra.mxu0 0.0
    %109 = vmatprep.subr.mxu0 0.0
    %110 = vmatpush1.msra.mxu0 0.0
    %111 = vmatprep.subr.mxu0 0.0
    %112 = vmatpush1.msra.mxu0 0.0
    %113 = vmatprep.subr.mxu0 0.0
    %114 = vmatpush1.msra.mxu0 0.0
    %115 = vmatprep.subr.mxu0 0.0
    %116 = vmatpush1.msra.mxu0 0.0
    %117 = vmatprep.subr.mxu0 0.0
    %118 = vmatpush1.msra.mxu0 0.0
    %119 = vmatprep.subr.mxu0 0.0
    %120 = vmatpush1.msra.mxu0 0.0
    %121 = vmatprep.subr.mxu0 0.0
    %122 = vmatpush1.msra.mxu0 %v83
    %123 = vmatprep.subr.mxu0 0.0
    %124 = vmatpush1.msra.mxu0 %v82
    %125 = vmatprep.subr.mxu0 0.0
    %126 = vmatpush1.msra.mxu0 %v81
    %127 = vmatprep.subr.mxu0 0.0
    %128 = vmatpush2.msra.mxu0 0.0
    %129 = vmatprep.subr.mxu0 0.0
    %130 = vmatpush2.msra.mxu0 0.0
    %131 = vmatprep.subr.mxu0 0.0
    %132 = vmatpush2.msra.mxu0 0.0
    %133 = vmatprep.subr.mxu0 0.0
    %134 = vmatpush2.msra.mxu0 0.0
    %135 = vmatprep.subr.mxu0 0.0
    %136 = vmatpush2.msra.mxu0 0.0
    %137 = vmatprep.subr.mxu0 0.0
    %138 = vmatpush2.msra.mxu0 0.0
    %139 = vmatprep.subr.mxu0 0.0
    %140 = vmatpush2.msra.mxu0 0.0
    %141 = vmatprep.subr.mxu0 0.0
    %142 = vmatpush2.msra.mxu0 0.0
    %143 = vmatprep.subr.mxu0 0.0
    %144 = vmatpush2.msra.mxu0 0.0
    %145 = vmatprep.subr.mxu0 0.0
    %146 = vmatpush2.msra.mxu0 0.0
    %147 = vmatprep.subr.mxu0 0.0
    %148 = vmatpush2.msra.mxu0 0.0
    %149 = vmatprep.subr.mxu0 0.0
    %150 = vmatpush2.msra.mxu0 0.0
    %151 = vmatprep.subr.mxu0 0.0
    %152 = vmatpush2.msra.mxu0 0.0
    %153 = vmatprep.subr.mxu0 0.0
    %154 = vmatpush2.msra.mxu0 0.0
    %155 = vmatprep.subr.mxu0 0.0
    %156 = vmatpush2.msra.mxu0 0.0
    %157 = vmatprep.subr.mxu0 0.0
    %158 = vmatpush2.msra.mxu0 0.0
    %159 = vmatprep.mubr.f32.mxu0 0.0
    %160 = vmatmul.mubr.f32.gmra.mxu0 %v93
    %v161 = vpop.f32.mrf.mxu0
    %v162 = vadd.f32 %v89, %v161
    %v163 = vpop.f32.mrf.mxu0
    %164 = vdwg.mxu0
    %v165 = vmax.f32 %v162, 0.0
    %v166 = vld [vmem:[#allocation7] sm:$0xff]
    %v167 = vld [vmem:[#allocation7 + $0x8] sm:$0xff]
    %v168 = vld [vmem:[#allocation7 + $0x10] sm:$0xff]
    %v169 = vld [vmem:[#allocation7 + $0x18] sm:$0xff]
    %v170 = vld [vmem:[#allocation7 + $0x20] sm:$0xff]
    %v171 = vld [vmem:[#allocation7 + $0x28] sm:$0xff]
    %v172 = vld [vmem:[#allocation7 + $0x30] sm:$0xff]
    %v173 = vld [vmem:[#allocation7 + $0x38] sm:$0xff]
    %v174 = vld [vmem:[%s4] sm:$0x1]
    %v176 = vlaneseq
    %v177 = vshrl.u32 %v176, 7
    %v178 = vsub.s32 0, %v177
    %v179 = vrot.slane %v174, %v178
    %vm181 = vcmask 523264
    %v183 = vsel %vm181, %v165, 0
    %185 = vmatprep.subr.mxu0 0.0
    %186 = vmatpush1.msra.mxu0 0.0
    %187 = vmatprep.subr.mxu0 0.0
    %188 = vmatpush1.msra.mxu0 0.0
    %189 = vmatprep.subr.mxu0 0.0
    %190 = vmatpush1.msra.mxu0 0.0
    %191 = vmatprep.subr.mxu0 0.0
    %192 = vmatpush1.msra.mxu0 0.0
    %193 = vmatprep.subr.mxu0 0.0
    %194 = vmatpush1.msra.mxu0 0.0
    %195 = vmatprep.subr.mxu0 0.0
    %196 = vmatpush1.msra.mxu0 0.0
    %197 = vmatprep.subr.mxu0 0.0
    %198 = vmatpush1.msra.mxu0 0.0
    %199 = vmatprep.subr.mxu0 0.0
    %200 = vmatpush1.msra.mxu0 0.0
    %201 = vmatprep.subr.mxu0 0.0
    %202 = vmatpush1.msra.mxu0 %v173
    %203 = vmatprep.subr.mxu0 0.0
    %204 = vmatpush1.msra.mxu0 %v172
    %205 = vmatprep.subr.mxu0 0.0
    %206 = vmatpush1.msra.mxu0 %v171
    %207 = vmatprep.subr.mxu0 0.0
    %208 = vmatpush1.msra.mxu0 %v170
    %209 = vmatprep.subr.mxu0 0.0
    %210 = vmatpush1.msra.mxu0 %v169
    %211 = vmatprep.subr.mxu0 0.0
    %212 = vmatpush1.msra.mxu0 %v168
    %213 = vmatprep.subr.mxu0 0.0
    %214 = vmatpush1.msra.mxu0 %v167
    %215 = vmatprep.subr.mxu0 0.0
    %216 = vmatpush1.msra.mxu0 %v166
    %217 = vmatprep.subr.mxu0 0.0
    %218 = vmatpush2.msra.mxu0 0.0
    %219 = vmatprep.subr.mxu0 0.0
    %220 = vmatpush2.msra.mxu0 0.0
    %221 = vmatprep.subr.mxu0 0.0
    %222 = vmatpush2.msra.mxu0 0.0
    %223 = vmatprep.subr.mxu0 0.0
    %224 = vmatpush2.msra.mxu0 0.0
    %225 = vmatprep.subr.mxu0 0.0
    %226 = vmatpush2.msra.mxu0 0.0
    %227 = vmatprep.subr.mxu0 0.0
    %228 = vmatpush2.msra.mxu0 0.0
    %229 = vmatprep.subr.mxu0 0.0
    %230 = vmatpush2.msra.mxu0 0.0
    %231 = vmatprep.subr.mxu0 0.0
    %232 = vmatpush2.msra.mxu0 0.0
    %233 = vmatprep.subr.mxu0 0.0
    %234 = vmatpush2.msra.mxu0 0.0
    %235 = vmatprep.subr.mxu0 0.0
    %236 = vmatpush2.msra.mxu0 0.0
    %237 = vmatprep.subr.mxu0 0.0
    %238 = vmatpush2.msra.mxu0 0.0
    %239 = vmatprep.subr.mxu0 0.0
    %240 = vmatpush2.msra.mxu0 0.0
    %241 = vmatprep.subr.mxu0 0.0
    %242 = vmatpush2.msra.mxu0 0.0
    %243 = vmatprep.subr.mxu0 0.0
    %244 = vmatpush2.msra.mxu0 0.0
    %245 = vmatprep.subr.mxu0 0.0
    %246 = vmatpush2.msra.mxu0 0.0
    %247 = vmatprep.subr.mxu0 0.0
    %248 = vmatpush2.msra.mxu0 0.0
    %249 = vmatprep.mubr.f32.mxu0 0.0
    %250 = vmatmul.mubr.f32.gmra.mxu0 %v183
    %v251 = vpop.f32.mrf.mxu0
    %v252 = vadd.f32 %v179, %v251
    %v253 = vpop.f32.mrf.mxu0
    %254 = vdwg.mxu0
    %v255 = vmax.f32 %v252, 0.0
    %v256 = vld [vmem:[#allocation8] sm:$0xff]
    %v257 = vld [vmem:[#allocation8 + $0x8] sm:$0xff]
    %v258 = vld [vmem:[#allocation8 + $0x10] sm:$0xff]
    %v259 = vld [vmem:[#allocation8 + $0x18] sm:$0xff]
    %v260 = vld [vmem:[#allocation8 + $0x20] sm:$0xff]
    %v261 = vld [vmem:[#allocation8 + $0x28] sm:$0xff]
    %v262 = vld [vmem:[#allocation8 + $0x30] sm:$0xff]
    %v263 = vld [vmem:[#allocation8 + $0x38] sm:$0xff]
    %v264 = vld [vmem:[%s6] sm:$0x1]
    %v266 = vlaneseq
    %v267 = vshrl.u32 %v266, 7
    %v268 = vsub.s32 0, %v267
    %v269 = vrot.slane %v264, %v268
    %v272 = vsel %vm181, %v255, 0
    %274 = vmatprep.subr.mxu0 0.0
    %275 = vmatpush1.msra.mxu0 0.0
    %276 = vmatprep.subr.mxu0 0.0
    %277 = vmatpush1.msra.mxu0 0.0
    %278 = vmatprep.subr.mxu0 0.0
    %279 = vmatpush1.msra.mxu0 0.0
    %280 = vmatprep.subr.mxu0 0.0
    %281 = vmatpush1.msra.mxu0 0.0
    %282 = vmatprep.subr.mxu0 0.0
    %283 = vmatpush1.msra.mxu0 0.0
    %284 = vmatprep.subr.mxu0 0.0
    %285 = vmatpush1.msra.mxu0 0.0
    %286 = vmatprep.subr.mxu0 0.0
    %287 = vmatpush1.msra.mxu0 0.0
    %288 = vmatprep.subr.mxu0 0.0
    %289 = vmatpush1.msra.mxu0 0.0
    %290 = vmatprep.subr.mxu0 0.0
    %291 = vmatpush1.msra.mxu0 %v263
    %292 = vmatprep.subr.mxu0 0.0
    %293 = vmatpush1.msra.mxu0 %v262
    %294 = vmatprep.subr.mxu0 0.0
    %295 = vmatpush1.msra.mxu0 %v261
    %296 = vmatprep.subr.mxu0 0.0
    %297 = vmatpush1.msra.mxu0 %v260
    %298 = vmatprep.subr.mxu0 0.0
    %299 = vmatpush1.msra.mxu0 %v259
    %300 = vmatprep.subr.mxu0 0.0
    %301 = vmatpush1.msra.mxu0 %v258
    %302 = vmatprep.subr.mxu0 0.0
    %303 = vmatpush1.msra.mxu0 %v257
    %304 = vmatprep.subr.mxu0 0.0
    %305 = vmatpush1.msra.mxu0 %v256
    %306 = vmatprep.subr.mxu0 0.0
    %307 = vmatpush2.msra.mxu0 0.0
    %308 = vmatprep.subr.mxu0 0.0
    %309 = vmatpush2.msra.mxu0 0.0
    %310 = vmatprep.subr.mxu0 0.0
    %311 = vmatpush2.msra.mxu0 0.0
    %312 = vmatprep.subr.mxu0 0.0
    %313 = vmatpush2.msra.mxu0 0.0
    %314 = vmatprep.subr.mxu0 0.0
    %315 = vmatpush2.msra.mxu0 0.0
    %316 = vmatprep.subr.mxu0 0.0
    %317 = vmatpush2.msra.mxu0 0.0
    %318 = vmatprep.subr.mxu0 0.0
    %319 = vmatpush2.msra.mxu0 0.0
    %320 = vmatprep.subr.mxu0 0.0
    %321 = vmatpush2.msra.mxu0 0.0
    %322 = vmatprep.subr.mxu0 0.0
    %323 = vmatpush2.msra.mxu0 0.0
    %324 = vmatprep.subr.mxu0 0.0
    %325 = vmatpush2.msra.mxu0 0.0
    %326 = vmatprep.subr.mxu0 0.0
    %327 = vmatpush2.msra.mxu0 0.0
    %328 = vmatprep.subr.mxu0 0.0
    %329 = vmatpush2.msra.mxu0 0.0
    %330 = vmatprep.subr.mxu0 0.0
    %331 = vmatpush2.msra.mxu0 0.0
    %332 = vmatprep.subr.mxu0 0.0
    %333 = vmatpush2.msra.mxu0 0.0
    %334 = vmatprep.subr.mxu0 0.0
    %335 = vmatpush2.msra.mxu0 0.0
    %336 = vmatprep.subr.mxu0 0.0
    %337 = vmatpush2.msra.mxu0 0.0
    %338 = vmatprep.mubr.f32.mxu0 0.0
    %339 = vmatmul.mubr.f32.gmra.mxu0 %v272
    %v340 = vpop.f32.mrf.mxu0
    %v341 = vadd.f32 %v269, %v340
    %v342 = vpop.f32.mrf.mxu0
    %343 = vdwg.mxu0
    %vm344 = vcmask 64512
    %345 = vst.msk [vmem:[#allocation10] sm:$0xff] %vm344, %v341
    // Predicated region
    $region46: #{tpu_custom_call.1} parent=1 // pred_check
      _
    $region47: #{tpu_custom_call.1} parent=1 // pred_check_branch
      %347 = sbr.rel (0) target = $region49
    $region48: #{tpu_custom_call.1} parent=1 // pred_region
      %s349 = ssub.s32 128, 128
      %350 = vsyncadd [#allocation4], %s349
      %s352 = sshll.u32 [#allocation10], 4
      %s353 = int_to_ptr.vmem [resolvable:$true] %s352
      %355 = dma.vmem_to_hbm [thread:$0]  %s353, 128, %s7, [#allocation4]
    $region49: #{tpu_custom_call.1} parent=1 // pred_fallthru
      _
    // Predicated region
    $region50: #{tpu_custom_call.1} parent=1 // pred_check
      _
    $region51: #{tpu_custom_call.1} parent=1 // pred_check_branch
      %357 = sbr.rel (0) target = $region53
    $region52: #{tpu_custom_call.1} parent=1 // pred_region
      %358 = dma.done [#allocation4], 128
    $region53: #{tpu_custom_call.1} parent=1 // pred_fallthru
      _
    %359 = vsyncpa [#allocation3], 1
    %360 = vsyncpa [#allocation6], 1
    %361 = vsyncpa [#allocation9], 1
    %362 = vsyncpa [#allocation4], 1

</llo_original>
